<compile_context>
chip_gen: v7x
topology: tpu7x:2x2x1
jax: 0.10.0
libtpu: 0.0.40
codegen_flags: <defaults>
</compile_context>

<pallas_src>
import functools

import jax
import jax.numpy as jnp
from jax.experimental import pallas as pl
from jax.experimental.pallas import tpu as pltpu


def _label_smoothing_kernel(tgt_ref, x_ref, out_ref, *,
                            num_classes, fill, confidence, ignore_index):
    """Per-row smoothed NLL for one (tile_rows, C) tile of logits.

    Uses   row_loss = -( fill * sum_c logp  +  (confidence - fill) * logp[t] )
    with   sum_c logp = sum_c x - C*(m + lse),   logp[t] = x[t] - m - lse,
    so only per-row lane reductions over x are needed.
    """
    x = x_ref[...].astype(jnp.float32)                       # (TM, C)
    tm = x.shape[0]

    tgt = tgt_ref[...]                                       # (TM, 1) int32
    ignore = tgt == ignore_index                              # (TM, 1) bool
    tgt_safe = jnp.where(ignore, 0, tgt)                      # masked_fill(ignore, 0)

    # Row-wise reductions over the class (lane) axis.
    m = jnp.max(x, axis=-1, keepdims=True)                    # (TM, 1)
    sumexp = jnp.sum(jnp.exp(x - m), axis=-1, keepdims=True)  # (TM, 1)
    lse = jnp.log(sumexp)                                     # (TM, 1)
    sum_x = jnp.sum(x, axis=-1, keepdims=True)                # (TM, 1)

    cls_ids = jax.lax.broadcasted_iota(jnp.int32, (tm, num_classes), 1)
    onehot = cls_ids == tgt_safe
    x_t = jnp.sum(jnp.where(onehot, x, 0.0), axis=-1, keepdims=True)  # x[i, t_i]

    m_lse = m + lse
    sum_logp = sum_x - num_classes * m_lse                    # sum_c log_softmax(x)
    logp_t = x_t - m_lse                                      # log_softmax(x)[target]

    row_loss = -(fill * sum_logp + (confidence - fill) * logp_t)
    row_loss = jnp.where(ignore, 0.0, row_loss)               # ignored rows -> 0
    out_ref[...] = row_loss


def label_smoothing_loss(x, target, *, classes, smoothing=0.0,
                         ignore_index=-100, max_block_bytes=2 * 1024 * 1024):
    """Pallas TPU implementation of LabelSmoothingLoss.forward."""
    n, c = x.shape
    assert c == classes
    assert classes >= 2, "smoothing / (classes - 1) requires classes >= 2"

    # Tile sizing: biggest row tile whose (tile_rows, C) f32 block stays under
    # max_block_bytes per pipeline buffer (double-buffered by BlockSpec),
    # capped at 1024 rows and at the (8-rounded) problem size; multiple of 8
    # to satisfy the (8, 128) sublane tiling rule.
    tile_rows = max(8, min(1024, (max_block_bytes // (c * 4)) // 8 * 8))
    tile_rows = min(tile_rows, ((n + 7) // 8) * 8)
    num_tiles = (n + tile_rows - 1) // tile_rows
    n_pad = num_tiles * tile_rows

    target = target.astype(jnp.int32)
    if n_pad != n:
        x = jnp.pad(x, ((0, n_pad - n), (0, 0)))
        target = jnp.pad(target, (0, n_pad - n), constant_values=ignore_index)
    target2d = target.reshape(n_pad, 1)

    kernel = functools.partial(
        _label_smoothing_kernel,
        num_classes=c,
        fill=float(smoothing) / (classes - 1),
        confidence=1.0 - float(smoothing),
        ignore_index=int(ignore_index),
    )

    row_losses = pl.pallas_call(
        kernel,
        out_shape=jax.ShapeDtypeStruct((n_pad, 1), jnp.float32),
        grid_spec=pltpu.PrefetchScalarGridSpec(
            num_scalar_prefetch=0,
            grid=(num_tiles,),
            in_specs=[
                pl.BlockSpec((tile_rows, 1), lambda i: (i, 0)),   # target ids
                pl.BlockSpec((tile_rows, c), lambda i: (i, 0)),   # logits
            ],
            out_specs=pl.BlockSpec((tile_rows, 1), lambda i: (i, 0)),
        ),
        compiler_params=pltpu.CompilerParams(
            dimension_semantics=("parallel",),     # independent tiles -> megacore-shardable
            vmem_limit_bytes=32 * 1024 * 1024,
        ),
    )(target2d, x)

    # Mean over ALL rows (ignored rows count in the denominator), matching the
    # PyTorch module.  Padded rows contribute exactly 0.
    return jnp.sum(row_losses) / jnp.float32(n)


def label_smoothing_loss_ref(x, target, *, classes, smoothing=0.0,
                             ignore_index=-100):
    """Pure-JAX reference mirroring the PyTorch code."""
    logp = jax.nn.log_softmax(x, axis=-1)
    ignore = target == ignore_index
    tgt = jnp.where(ignore, 0, target)
    true_dist = jnp.full_like(x, smoothing / (classes - 1))
    onehot = jax.nn.one_hot(tgt, classes, dtype=bool)
    true_dist = jnp.where(onehot, 1.0 - smoothing, true_dist)
    true_dist = jnp.where(ignore[:, None], 0.0, true_dist)
    return jnp.mean(jnp.sum(-true_dist * logp, axis=-1))


if __name__ == "__main__":
    key = jax.random.PRNGKey(0)
    smoothing = 0.1
    ignore_index = -100

    # Case 1: shapes matching the original demo (32 examples, 32 classes).
    N, C = 32, 32
    kx, kt, ki, key = jax.random.split(key, 4)
    x = jax.random.normal(kx, (N, C), dtype=jnp.float32)
    target = jax.random.randint(kt, (N,), 0, C, dtype=jnp.int32)
    target = jnp.where(jax.random.bernoulli(ki, 0.25, (N,)), ignore_index, target)

    loss = jax.block_until_ready(
        label_smoothing_loss(x, target, classes=C, smoothing=smoothing,
                             ignore_index=ignore_index))
    ref = label_smoothing_loss_ref(x, target, classes=C, smoothing=smoothing,
                                   ignore_index=ignore_index)
    assert jnp.allclose(loss, ref, atol=1e-5, rtol=1e-5), (loss, ref)

    # Case 2: ragged shapes + forced multi-tile grid (exercises padding and
    # the "parallel" multi-step pipeline with a small per-buffer budget).
    N2, C2 = 200, 130
    kx, kt, ki, key = jax.random.split(key, 4)
    x2 = jax.random.normal(kx, (N2, C2), dtype=jnp.float32)
    target2 = jax.random.randint(kt, (N2,), 0, C2, dtype=jnp.int32)
    target2 = jnp.where(jax.random.bernoulli(ki, 0.25, (N2,)), ignore_index, target2)

    loss2 = jax.block_until_ready(
        label_smoothing_loss(x2, target2, classes=C2, smoothing=smoothing,
                             ignore_index=ignore_index, max_block_bytes=32 * 1024))
    ref2 = label_smoothing_loss_ref(x2, target2, classes=C2, smoothing=smoothing,
                                    ignore_index=ignore_index)
    assert jnp.allclose(loss2, ref2, atol=1e-5, rtol=1e-5), (loss2, ref2)

    print("KERNEL_OK")
</pallas_src>

<mosaic_0001>
module attributes {stable_mosaic.version = 11 : i64} {
  func.func @_label_smoothing_kernel(%arg0: i32, %arg1: memref<32x1xi32, #tpu.memory_space<vmem>>, %arg2: memref<32x32xf32, #tpu.memory_space<vmem>>, %arg3: memref<32x1xf32, #tpu.memory_space<vmem>>) attributes {dimension_semantics = [#tpu.dimension_semantics<parallel>], iteration_bounds = array<i64: 1>, scalar_prefetch = 0 : i64, scratch_operands = 0 : i64, tpu.core_type = #tpu.core_type<tc>, window_params = [{transform_indices = @transform_0, window_bounds = array<i64: 32, 1>}, {transform_indices = @transform_1, window_bounds = array<i64: 32, 32>}, {transform_indices = @transform_2, window_bounds = array<i64: 32, 1>}]} {
    %c0 = arith.constant 0 : index
    %c0_0 = arith.constant 0 : index
    %0 = vector.load %arg2[%c0, %c0_0] : memref<32x32xf32, #tpu.memory_space<vmem>>, vector<32x32xf32>
    %c0_1 = arith.constant 0 : index
    %c0_2 = arith.constant 0 : index
    %1 = vector.load %arg1[%c0_1, %c0_2] : memref<32x1xi32, #tpu.memory_space<vmem>>, vector<32x1xi32>
    %c-100_i32 = arith.constant -100 : i32
    %2 = vector.broadcast %c-100_i32 : i32 to vector<32x1xi32>
    %3 = arith.cmpi eq, %1, %2 : vector<32x1xi32>
    %c0_i32 = arith.constant 0 : i32
    %4 = vector.broadcast %c0_i32 : i32 to vector<32x1xi32>
    %5 = arith.select %3, %4, %1 : vector<32x1xi1>, vector<32x1xi32>
    %cst = arith.constant dense<0xFF800000> : vector<32xf32>
    %6 = vector.multi_reduction <maximumf>, %0, %cst [1] : vector<32x32xf32> to vector<32xf32>
    %7 = vector.shape_cast %6 : vector<32xf32> to vector<32x1xf32>
    %8 = vector.broadcast %7 : vector<32x1xf32> to vector<32x32xf32>
    %9 = arith.subf %0, %8 : vector<32x32xf32>
    %10 = math.exp %9 : vector<32x32xf32>
    %cst_3 = arith.constant dense<0.000000e+00> : vector<32xf32>
    %11 = vector.multi_reduction <add>, %10, %cst_3 [1] : vector<32x32xf32> to vector<32xf32>
    %12 = vector.shape_cast %11 : vector<32xf32> to vector<32x1xf32>
    %13 = math.log %12 : vector<32x1xf32>
    %cst_4 = arith.constant dense<0.000000e+00> : vector<32xf32>
    %14 = vector.multi_reduction <add>, %0, %cst_4 [1] : vector<32x32xf32> to vector<32xf32>
    %15 = vector.shape_cast %14 : vector<32xf32> to vector<32x1xf32>
    %16 = tpu.iota {dimensions = array<i32: 1>} : vector<32x32xi32>
    %17 = vector.broadcast %5 : vector<32x1xi32> to vector<32x32xi32>
    %18 = arith.cmpi eq, %16, %17 : vector<32x32xi32>
    %cst_5 = arith.constant 0.000000e+00 : f32
    %19 = vector.broadcast %cst_5 : f32 to vector<32x32xf32>
    %20 = arith.select %18, %0, %19 : vector<32x32xi1>, vector<32x32xf32>
    %cst_6 = arith.constant dense<0.000000e+00> : vector<32xf32>
    %21 = vector.multi_reduction <add>, %20, %cst_6 [1] : vector<32x32xf32> to vector<32xf32>
    %22 = vector.shape_cast %21 : vector<32xf32> to vector<32x1xf32>
    %23 = arith.addf %7, %13 : vector<32x1xf32>
    %cst_7 = arith.constant 3.200000e+01 : f32
    %24 = vector.broadcast %cst_7 : f32 to vector<32x1xf32>
    %25 = arith.mulf %24, %23 : vector<32x1xf32>
    %26 = arith.subf %15, %25 : vector<32x1xf32>
    %27 = arith.subf %22, %23 : vector<32x1xf32>
    %cst_8 = arith.constant 0.0032258064 : f32
    %28 = vector.broadcast %cst_8 : f32 to vector<32x1xf32>
    %29 = arith.mulf %28, %26 : vector<32x1xf32>
    %cst_9 = arith.constant 0.896774172 : f32
    %30 = vector.broadcast %cst_9 : f32 to vector<32x1xf32>
    %31 = arith.mulf %30, %27 : vector<32x1xf32>
    %32 = arith.addf %29, %31 : vector<32x1xf32>
    %cst_10 = arith.constant 0.000000e+00 : f32
    %33 = vector.broadcast %cst_10 : f32 to vector<32x1xf32>
    %34 = arith.subf %33, %32 : vector<32x1xf32>
    %cst_11 = arith.constant 0.000000e+00 : f32
    %35 = vector.broadcast %cst_11 : f32 to vector<32x1xf32>
    %36 = arith.select %3, %35, %34 : vector<32x1xi1>, vector<32x1xf32>
    %c0_12 = arith.constant 0 : index
    %c0_13 = arith.constant 0 : index
    %37 = vector.load %arg3[%c0_12, %c0_13] : memref<32x1xf32, #tpu.memory_space<vmem>>, vector<32x1xf32>
    tpu.vector_store %arg3[%c0_12, %c0_13], %36 {strides = array<i32>} : memref<32x1xf32, #tpu.memory_space<vmem>>, vector<32x1xf32>,
    return
  }
  func.func @transform_0(%arg0: i32) -> (i32, i32) {
    %c0_i32 = arith.constant 0 : i32
    %c0_i32_0 = arith.constant 0 : i32
    return %arg0, %c0_i32 : i32, i32
  }
  func.func @transform_1(%arg0: i32) -> (i32, i32) {
    %c0_i32 = arith.constant 0 : i32
    %c0_i32_0 = arith.constant 0 : i32
    return %arg0, %c0_i32 : i32, i32
  }
  func.func @transform_2(%arg0: i32) -> (i32, i32) {
    %c0_i32 = arith.constant 0 : i32
    %c0_i32_0 = arith.constant 0 : i32
    return %arg0, %c0_i32 : i32, i32
  }
}

</mosaic_0001>

<llo_original>
// kernel: tpu_custom_call.1
$region0: #{tpu_custom_call.1}
  #allocation0 [shape = 'u32[]', space=smem, size = 0x4, offset = 0x4, fixed_abs, tag = 'smem constant byte address 0x4 - core index']
  #allocation1 [shape = 'u32[144,128]{1,0:T(1,128)}', space=vmem, size = 0x12000, scoped, tag = 'internal scratch']
  %s0 = inlined_call_operand.vmem [shape: s32[32,1], index: 0, kind: input, shape index: {}]
  %s1 = inlined_call_operand.vmem [shape: f32[32,32], index: 1, kind: input, shape index: {}]
  %s2 = inlined_call_operand.vmem [shape: f32[32,1], index: 2, kind: output, shape index: {}]
  %s3 = sld [smem:[#allocation0]]
  $region18: #{tpu_custom_call.1} parent=0
    _
  %s5 = ssub.s32 1, %s3
  %s6 = scalar_select 0, %s5, %s3
  // Predicated region
  $region2: #{tpu_custom_call.1} parent=0 // pred_check
    _
  $region3: #{tpu_custom_call.1} parent=0 // pred_check_branch
    %8 = sbr.rel (0) target = $region5
  $region4: #{tpu_custom_call.1} parent=0 // pred_region
    _
  $region5: #{tpu_custom_call.1} parent=0 // pred_fallthru
    _
  // Predicated region
  $region6: #{tpu_custom_call.1} parent=0 // pred_check
    _
  $region7: #{tpu_custom_call.1} parent=0 // pred_check_branch
    %10 = sbr.rel (0) target = $region9
  $region8: #{tpu_custom_call.1} parent=0 // pred_region
    _
  $region9: #{tpu_custom_call.1} parent=0 // pred_fallthru
    _
  %v11 = vld [vmem:[%s1] sm:$0xff]
  %v12 = vld [vmem:[%s1 + $0x8] sm:$0xff]
  %v13 = vld [vmem:[%s1 + $0x10] sm:$0xff]
  %v14 = vld [vmem:[%s1 + $0x18] sm:$0xff]
  %v15 = vld [vmem:[%s0] sm:$0xff]
  %v16 = vld [vmem:[%s0 + $0x8] sm:$0xff]
  %v17 = vld [vmem:[%s0 + $0x10] sm:$0xff]
  %v18 = vld [vmem:[%s0 + $0x18] sm:$0xff]
  %vm19 = vcmp.eq.s32.totalorder %v15, 4294967196
  %vm20 = vcmp.eq.s32.totalorder %v16, 4294967196
  %vm21 = vcmp.eq.s32.totalorder %v17, 4294967196
  %vm22 = vcmp.eq.s32.totalorder %v18, 4294967196
  %v23 = vsel %vm19, 0, %v15
  %v24 = vsel %vm20, 0, %v16
  %v25 = vsel %vm21, 0, %v17
  %v26 = vsel %vm22, 0, %v18
  %vm27 = vcmask 261120
  %v28 = vsel %vm27, %v11, -inf
  %29 = vmax.xlane.f32.xlu0 %v28
  %v30 = vpop.xlane.xlu0 %29
  %v31 = vsel %vm27, %v12, -inf
  %32 = vmax.xlane.f32.xlu0 %v31
  %v33 = vpop.xlane.xlu0 %32
  %v34 = vsel %vm27, %v13, -inf
  %35 = vmax.xlane.f32.xlu0 %v34
  %v36 = vpop.xlane.xlu0 %35
  %v37 = vsel %vm27, %v14, -inf
  %38 = vmax.xlane.f32.xlu0 %v37
  %v39 = vpop.xlane.xlu0 %38
  %v40 = vsub.f32 %v11, %v30
  %v41 = vsub.f32 %v12, %v33
  %v42 = vsub.f32 %v13, %v36
  %v43 = vsub.f32 %v14, %v39
  %v44 = vmul.f32 %v40, 1.442695
  %v45 = vpow.pop %v44
  %v46 = vmul.f32 %v41, 1.442695
  %v47 = vpow.pop %v46
  %v48 = vmul.f32 %v42, 1.442695
  %v49 = vpow.pop %v48
  %v50 = vmul.f32 %v43, 1.442695
  %v51 = vpow.pop %v50
  %v52 = vsel %vm27, %v45, 0.0
  %53 = vadd.xlane.f32.xlu0 %v52
  %v54 = vpop.xlane.xlu0 %53
  %v55 = vsel %vm27, %v47, 0.0
  %56 = vadd.xlane.f32.xlu0 %v55
  %v57 = vpop.xlane.xlu0 %56
  %v58 = vsel %vm27, %v49, 0.0
  %59 = vadd.xlane.f32.xlu0 %v58
  %v60 = vpop.xlane.xlu0 %59
  %v61 = vsel %vm27, %v51, 0.0
  %62 = vadd.xlane.f32.xlu0 %v61
  %v63 = vpop.xlane.xlu0 %62
  %v64 = vlog2.pop %v54
  %v65 = vmul.f32 %v64, 0.6931472
  %v66 = vlog2.pop %v57
  %v67 = vmul.f32 %v66, 0.6931472
  %v68 = vlog2.pop %v60
  %v69 = vmul.f32 %v68, 0.6931472
  %v70 = vlog2.pop %v63
  %v71 = vmul.f32 %v70, 0.6931472
  %v72 = vsel %vm27, %v11, 0.0
  %73 = vadd.xlane.f32.xlu0 %v72
  %v74 = vpop.xlane.xlu0 %73
  %v75 = vsel %vm27, %v12, 0.0
  %76 = vadd.xlane.f32.xlu0 %v75
  %v77 = vpop.xlane.xlu0 %76
  %v78 = vsel %vm27, %v13, 0.0
  %79 = vadd.xlane.f32.xlu0 %v78
  %v80 = vpop.xlane.xlu0 %79
  %v81 = vsel %vm27, %v14, 0.0
  %82 = vadd.xlane.f32.xlu0 %v81
  %v83 = vpop.xlane.xlu0 %82
  %v84 = vlaneseq
  %v85 = vand.u32 %v84, 127
  %86 = vset.pattern.permute.xlu0 0
  %87 = vperm.xlu0 %86, %v23
  %v88 = vpop.permute.xlu0 %87
  %89 = vset.pattern.permute.xlu0 0
  %90 = vperm.xlu0 %89, %v24
  %v91 = vpop.permute.xlu0 %90
  %92 = vset.pattern.permute.xlu0 0
  %93 = vperm.xlu0 %92, %v25
  %v94 = vpop.permute.xlu0 %93
  %95 = vset.pattern.permute.xlu0 0
  %96 = vperm.xlu0 %95, %v26
  %v97 = vpop.permute.xlu0 %96
  %vm98 = vcmp.eq.s32.totalorder %v85, %v88
  %vm99 = vcmp.eq.s32.totalorder %v85, %v91
  %vm100 = vcmp.eq.s32.totalorder %v85, %v94
  %vm101 = vcmp.eq.s32.totalorder %v85, %v97
  %v102 = vsel %vm98, %v11, 0.0
  %v103 = vsel %vm99, %v12, 0.0
  %v104 = vsel %vm100, %v13, 0.0
  %v105 = vsel %vm101, %v14, 0.0
  %v106 = vsel %vm27, %v102, 0.0
  %107 = vadd.xlane.f32.xlu0 %v106
  %v108 = vpop.xlane.xlu0 %107
  %v109 = vsel %vm27, %v103, 0.0
  %110 = vadd.xlane.f32.xlu0 %v109
  %v111 = vpop.xlane.xlu0 %110
  %v112 = vsel %vm27, %v104, 0.0
  %113 = vadd.xlane.f32.xlu0 %v112
  %v114 = vpop.xlane.xlu0 %113
  %v115 = vsel %vm27, %v105, 0.0
  %116 = vadd.xlane.f32.xlu0 %v115
  %v117 = vpop.xlane.xlu0 %116
  %v118 = vadd.f32 %v30, %v65
  %v119 = vadd.f32 %v33, %v67
  %v120 = vadd.f32 %v36, %v69
  %v121 = vadd.f32 %v39, %v71
  %v122 = vmul.f32 %v118, 32.0
  %v123 = vmul.f32 %v119, 32.0
  %v124 = vmul.f32 %v120, 32.0
  %v125 = vmul.f32 %v121, 32.0
  %v126 = vsub.f32 %v74, %v122
  %v127 = vsub.f32 %v77, %v123
  %v128 = vsub.f32 %v80, %v124
  %v129 = vsub.f32 %v83, %v125
  %v130 = vsub.f32 %v108, %v118
  %v131 = vsub.f32 %v111, %v119
  %v132 = vsub.f32 %v114, %v120
  %v133 = vsub.f32 %v117, %v121
  %v134 = vmul.f32 %v126, 0.0032258064
  %v135 = vmul.f32 %v127, 0.0032258064
  %v136 = vmul.f32 %v128, 0.0032258064
  %v137 = vmul.f32 %v129, 0.0032258064
  %v138 = vmul.f32 %v130, 0.8967742
  %v139 = vmul.f32 %v131, 0.8967742
  %v140 = vmul.f32 %v132, 0.8967742
  %v141 = vmul.f32 %v133, 0.8967742
  %v142 = vadd.f32 %v134, %v138
  %v143 = vadd.f32 %v135, %v139
  %v144 = vadd.f32 %v136, %v140
  %v145 = vadd.f32 %v137, %v141
  %v146 = vsub.f32 0.0, %v142
  %v147 = vsub.f32 0.0, %v143
  %v148 = vsub.f32 0.0, %v144
  %v149 = vsub.f32 0.0, %v145
  %v150 = vsel %vm19, 0.0, %v146
  %v151 = vsel %vm20, 0.0, %v147
  %v152 = vsel %vm21, 0.0, %v148
  %v153 = vsel %vm22, 0.0, %v149
  %vm154 = vcmask 7168
  %155 = vst.msk [vmem:[%s2] sm:$0xff] %vm154, %v150
  %156 = vst.msk [vmem:[%s2 + $0x8] sm:$0xff] %vm154, %v151
  %157 = vst.msk [vmem:[%s2 + $0x10] sm:$0xff] %vm154, %v152
  %158 = vst.msk [vmem:[%s2 + $0x18] sm:$0xff] %vm154, %v153
  // Predicated region
  $region10: #{tpu_custom_call.1} parent=0 // pred_check
    _
  $region11: #{tpu_custom_call.1} parent=0 // pred_check_branch
    %160 = sbr.rel (0) target = $region13
  $region12: #{tpu_custom_call.1} parent=0 // pred_region
    _
  $region13: #{tpu_custom_call.1} parent=0 // pred_fallthru
    _
  // Predicated region
  $region14: #{tpu_custom_call.1} parent=0 // pred_check
    _
  $region15: #{tpu_custom_call.1} parent=0 // pred_check_branch
    %162 = sbr.rel (0) target = $region17
  $region16: #{tpu_custom_call.1} parent=0 // pred_region
    _
  $region17: #{tpu_custom_call.1} parent=0 // pred_fallthru
    _

</llo_original>
